<compile_context>
chip_gen: v7x
topology: tpu7x:2x2x1
jax: 0.10.0
libtpu: 0.0.40
codegen_flags: <defaults>
</compile_context>

<pallas_src>
import functools

import jax
import jax.numpy as jnp
from jax import lax
from jax.experimental import pallas as pl
from jax.experimental.pallas import tpu as pltpu

_LANE = 128


def _round_up(x, m):
    return ((x + m - 1) // m) * m


def _cdiv(a, b):
    return -(-a // b)


def _vmem_budget():
    """Per-generation (target physical bytes per input block, scoped VMEM limit)."""
    cap = None
    try:
        info = pltpu.get_tpu_info()
        for name in ("vmem_capacity_bytes", "vmem_bytes", "vmem_size_bytes"):
            v = getattr(info, name, None)
            if isinstance(v, int) and v > 0:
                cap = v
                break
    except Exception:
        cap = None
    if cap is not None and cap >= 96 * 1024 * 1024:
        # v5e / v6e: 128 MiB physical VMEM -> bigger blocks amortize per-step cost.
        return 8 * 1024 * 1024, 64 * 1024 * 1024
    # v7x (64 MiB physical) or unknown chip: conservative, safe everywhere.
    return 4 * 1024 * 1024, 32 * 1024 * 1024


def _choose_tiles(B, L, itemsize, target_block_bytes):
    """Pick (n_r, Rb, n_c, Ct) so each INPUT block's *physical* (sublane/lane
    padded) footprint is ~target_block_bytes, with no wrapper-side padding:
      * Rb == B (full dim) or a multiple of the dtype sublane count,
      * Ct == L (full dim) or a multiple of 128."""
    sub = {4: 8, 2: 16, 1: 32}.get(itemsize, 8)
    L128 = _round_up(L, _LANE)
    target_elems = max(_LANE * sub, target_block_bytes // itemsize)

    # Rows per block (physical rows are padded up to `sub`).
    row_cap = max(sub, (target_elems // L128) // sub * sub)
    if B <= row_cap:
        n_r, Rb = 1, B                                   # full batch dim
    else:
        Rb = min(_round_up(_cdiv(B, _cdiv(B, row_cap)), sub), row_cap)
        n_r = _cdiv(B, Rb)
    Rb_phys = _round_up(Rb, sub)

    # Columns per block: fill the remaining physical budget, multiple of 128.
    ct_cap = max(_LANE, (target_elems // Rb_phys) // _LANE * _LANE)
    if L128 <= ct_cap:
        n_c, Ct = 1, L                                   # full feature dim
    else:
        Ct = _round_up(_cdiv(L128, _cdiv(L128, ct_cap)), _LANE)
        n_c = _cdiv(L, Ct)

    # v7x megacore: expose >= 2 grid steps for medium/large single-block cases.
    if n_r * n_c == 1 and L128 >= 2 * _LANE and Rb_phys * L128 * itemsize >= (1 << 20):
        Ct = _round_up(_cdiv(L128, 2), _LANE)
        n_c = _cdiv(L, Ct)

    return n_r, Rb, n_c, Ct


def _wmse_partial_kernel(p_ref, t_ref, w_ref, o_ref, *, B, L, Rb, Ct, n_r, n_c):
    """One (Rb, Ct) tile -> one (8,128) output block holding its partial sum
    of w * (p - t)^2 at position [0, 0] (zeros elsewhere)."""
    c = pl.program_id(0)          # column-block index (outer, weight-resident)
    r = pl.program_id(1)          # row-block index (inner)

    d = p_ref[...].astype(jnp.float32) - t_ref[...].astype(jnp.float32)
    prod = d * d * w_ref[...]     # (Rb, Ct) * (1, Ct) broadcast

    # Mask non-dividing tail tiles. Static decision: aligned shapes skip this
    # entirely; where() selects 0 so OOB garbage (even NaN/Inf) never leaks in.
    valid = None
    if n_c * Ct > L:
        col = c * Ct + lax.broadcasted_iota(jnp.int32, (Rb, Ct), 1)
        valid = col < L
    if n_r * Rb > B:
        row = r * Rb + lax.broadcasted_iota(jnp.int32, (Rb, Ct), 0)
        rmask = row < B
        valid = rmask if valid is None else (valid & rmask)
    if valid is not None:
        prod = jnp.where(valid, prod, 0.0)

    s = jnp.sum(prod, keepdims=True)                     # (1, 1) partial sum
    first = (lax.broadcasted_iota(jnp.int32, (8, _LANE), 0) == 0) & \
            (lax.broadcasted_iota(jnp.int32, (8, _LANE), 1) == 0)
    o_ref[...] = jnp.where(first, s, 0.0)                # lane-dense full-block store


@functools.partial(jax.jit, static_argnames=("weight_type", "block_bytes"))
def weighted_mse_loss(predictions, targets, weight_type="linear", alpha=0.1,
                      block_bytes=None):
    if predictions.shape != targets.shape:
        raise ValueError("predictions and targets must have the same shape")
    B, T, D = predictions.shape
    L = T * D
    itemsize = jnp.dtype(predictions.dtype).itemsize

    target_block_bytes, vmem_limit = _vmem_budget()
    if block_bytes is not None:                          # testing / tuning hook
        target_block_bytes = int(block_bytes)
    n_r, Rb, n_c, Ct = _choose_tiles(B, L, itemsize, target_block_bytes)

    # Per-timestep weights (tiny), broadcast over D, as a (1, L) f32 slab.
    tidx = jnp.arange(T, dtype=jnp.float32)
    if weight_type == "linear":
        w_t = 1.0 + alpha * tidx             # == linspace(1, 1+alpha*(T-1), T)
    elif weight_type == "exponential":
        w_t = jnp.exp(alpha * tidx)
    else:
        raise ValueError("Invalid weight_type. Choose 'linear' or 'exponential'.")
    w_flat = jnp.broadcast_to(w_t[:, None], (T, D)).reshape(1, L).astype(jnp.float32)

    p2 = jnp.reshape(predictions, (B, L))
    t2 = jnp.reshape(targets, (B, L))

    kernel = functools.partial(_wmse_partial_kernel,
                               B=B, L=L, Rb=Rb, Ct=Ct, n_r=n_r, n_c=n_c)

    partials = pl.pallas_call(
        kernel,
        out_shape=jax.ShapeDtypeStruct((n_r * 8, n_c * _LANE), jnp.float32),
        grid=(n_c, n_r),   # column outer -> weight block index constant inner
        in_specs=[
            pl.BlockSpec((Rb, Ct), lambda c, r: (r, c)),   # predictions tile
            pl.BlockSpec((Rb, Ct), lambda c, r: (r, c)),   # targets tile
            pl.BlockSpec((1, Ct), lambda c, r: (0, c)),    # weight slab (resident)
        ],
        out_specs=pl.BlockSpec((8, _LANE), lambda c, r: (r, c)),
        compiler_params=pltpu.CompilerParams(
            dimension_semantics=("parallel", "parallel"),
            vmem_limit_bytes=vmem_limit,
        ),
    )(p2, t2, w_flat)

    # Mean over the TRUE element count; masked tails contribute exactly 0.
    return jnp.sum(partials) / (B * T * D)


def _reference(predictions, targets, weight_type="linear", alpha=0.1):
    T = predictions.shape[1]
    if weight_type == "linear":
        w = jnp.linspace(1.0, 1.0 + alpha * (T - 1), T)
    else:
        w = jnp.exp(alpha * jnp.arange(T, dtype=jnp.float32))
    p = predictions.astype(jnp.float32)
    t = targets.astype(jnp.float32)
    return jnp.mean((p - t) ** 2 * w[None, :, None])


if __name__ == "__main__":
    key = jax.random.PRNGKey(0)
    k1, k2, k3, k4 = jax.random.split(key, 4)

    # Case 1: small, tile-aligned shape (single full-dim block, no masking).
    B, T, D = 2, 8, 32
    preds = jax.random.normal(k1, (B, T, D), dtype=jnp.float32)
    targs = jax.random.normal(k2, (B, T, D), dtype=jnp.float32)
    for wt in ("linear", "exponential"):
        loss = weighted_mse_loss(preds, targs, weight_type=wt, alpha=0.1)
        jax.block_until_ready(loss)
        ref = _reference(preds, targs, weight_type=wt, alpha=0.1)
        assert jnp.allclose(loss, ref, rtol=1e-5, atol=1e-6), (wt, loss, ref)

    # Case 2: odd shape + forced tiny blocks -> exercises multi-block grid,
    # in-kernel row/column tail masks, and the resident weight tile.
    B2, T2, D2 = 20, 7, 33
    preds2 = jax.random.normal(k3, (B2, T2, D2), dtype=jnp.float32)
    targs2 = jax.random.normal(k4, (B2, T2, D2), dtype=jnp.float32)
    for wt in ("linear", "exponential"):
        loss = weighted_mse_loss(preds2, targs2, weight_type=wt, alpha=0.1,
                                 block_bytes=4096)
        jax.block_until_ready(loss)
        ref = _reference(preds2, targs2, weight_type=wt, alpha=0.1)
        assert jnp.allclose(loss, ref, rtol=1e-5, atol=1e-6), (wt, loss, ref)

    print("KERNEL_OK")
</pallas_src>

<mosaic_0001>
module attributes {stable_mosaic.version = 11 : i64} {
  func.func @_wmse_partial_kernel(%arg0: i32, %arg1: i32, %arg2: memref<2x256xf32, #tpu.memory_space<vmem>>, %arg3: memref<2x256xf32, #tpu.memory_space<vmem>>, %arg4: memref<1x256xf32, #tpu.memory_space<vmem>>, %arg5: memref<8x128xf32, #tpu.memory_space<vmem>>) attributes {dimension_semantics = [#tpu.dimension_semantics<parallel>, #tpu.dimension_semantics<parallel>], iteration_bounds = array<i64: 1, 1>, scalar_prefetch = 0 : i64, scratch_operands = 0 : i64, tpu.core_type = #tpu.core_type<tc>, window_params = [{transform_indices = @transform_0, window_bounds = array<i64: 2, 256>}, {transform_indices = @transform_1, window_bounds = array<i64: 2, 256>}, {transform_indices = @transform_2, window_bounds = array<i64: 1, 256>}, {transform_indices = @transform_3, window_bounds = array<i64: 8, 128>}]} {
    %c0 = arith.constant 0 : index
    %c0_0 = arith.constant 0 : index
    %0 = vector.load %arg2[%c0, %c0_0] : memref<2x256xf32, #tpu.memory_space<vmem>>, vector<2x256xf32>
    %c0_1 = arith.constant 0 : index
    %c0_2 = arith.constant 0 : index
    %1 = vector.load %arg3[%c0_1, %c0_2] : memref<2x256xf32, #tpu.memory_space<vmem>>, vector<2x256xf32>
    %2 = arith.subf %0, %1 : vector<2x256xf32>
    %3 = arith.mulf %2, %2 : vector<2x256xf32>
    %c0_3 = arith.constant 0 : index
    %c0_4 = arith.constant 0 : index
    %4 = vector.load %arg4[%c0_3, %c0_4] : memref<1x256xf32, #tpu.memory_space<vmem>>, vector<1x256xf32>
    %5 = vector.broadcast %4 : vector<1x256xf32> to vector<2x256xf32>
    %6 = arith.mulf %3, %5 : vector<2x256xf32>
    %7 = vector.shape_cast %6 : vector<2x256xf32> to vector<1x2x256xf32>
    %cst = arith.constant dense<0.000000e+00> : vector<1xf32>
    %8 = vector.multi_reduction <add>, %7, %cst [1, 2] : vector<1x2x256xf32> to vector<1xf32>
    %9 = vector.shape_cast %8 : vector<1xf32> to vector<1x1x1xf32>
    %10 = vector.extract %9[0, 0, 0] : f32 from vector<1x1x1xf32>
    %11 = vector.broadcast %10 : f32 to vector<1x1xf32>
    %12 = tpu.iota {dimensions = array<i32: 0>} : vector<8x128xi32>
    %c0_i32 = arith.constant 0 : i32
    %13 = vector.broadcast %c0_i32 : i32 to vector<8x128xi32>
    %14 = arith.cmpi eq, %12, %13 : vector<8x128xi32>
    %15 = tpu.iota {dimensions = array<i32: 1>} : vector<8x128xi32>
    %c0_i32_5 = arith.constant 0 : i32
    %16 = vector.broadcast %c0_i32_5 : i32 to vector<8x128xi32>
    %17 = arith.cmpi eq, %15, %16 : vector<8x128xi32>
    %18 = arith.andi %14, %17 : vector<8x128xi1>
    %cst_6 = arith.constant 0.000000e+00 : f32
    %19 = vector.shape_cast %11 : vector<1x1xf32> to vector<1x1xf32>
    %20 = vector.broadcast %19 : vector<1x1xf32> to vector<8x128xf32>
    %21 = vector.broadcast %cst_6 : f32 to vector<8x128xf32>
    %22 = arith.select %18, %20, %21 : vector<8x128xi1>, vector<8x128xf32>
    %c0_7 = arith.constant 0 : index
    %c0_8 = arith.constant 0 : index
    %23 = vector.load %arg5[%c0_7, %c0_8] : memref<8x128xf32, #tpu.memory_space<vmem>>, vector<8x128xf32>
    tpu.vector_store %arg5[%c0_7, %c0_8], %22 {strides = array<i32>} : memref<8x128xf32, #tpu.memory_space<vmem>>, vector<8x128xf32>,
    return
  }
  func.func @transform_0(%arg0: i32, %arg1: i32) -> (i32, i32) {
    %c0_i32 = arith.constant 0 : i32
    return %arg1, %arg0 : i32, i32
  }
  func.func @transform_1(%arg0: i32, %arg1: i32) -> (i32, i32) {
    %c0_i32 = arith.constant 0 : i32
    return %arg1, %arg0 : i32, i32
  }
  func.func @transform_2(%arg0: i32, %arg1: i32) -> (i32, i32) {
    %c0_i32 = arith.constant 0 : i32
    %c0_i32_0 = arith.constant 0 : i32
    return %c0_i32, %arg0 : i32, i32
  }
  func.func @transform_3(%arg0: i32, %arg1: i32) -> (i32, i32) {
    %c0_i32 = arith.constant 0 : i32
    return %arg1, %arg0 : i32, i32
  }
}

</mosaic_0001>

<llo_original>
// kernel: weighted_mse_loss.1
$region0: #{weighted_mse_loss.1}
  #allocation0 [shape = 'u32[]', space=smem, size = 0x4, offset = 0x4, fixed_abs, tag = 'smem constant byte address 0x4 - core index']
  #allocation1 [shape = 'u32[144,128]{1,0:T(1,128)}', space=vmem, size = 0x12000, scoped, tag = 'internal scratch']
  %s0 = inlined_call_operand.vmem [shape: f32[2,256], index: 0, kind: input, shape index: {}]
  %s1 = inlined_call_operand.vmem [shape: f32[2,256], index: 1, kind: input, shape index: {}]
  %s2 = inlined_call_operand.vmem [shape: f32[1,256], index: 2, kind: input, shape index: {}]
  %s3 = inlined_call_operand.vmem [shape: f32[8,128], index: 3, kind: output, shape index: {}]
  %s4 = sld [smem:[#allocation0]]
  $region22: #{weighted_mse_loss.1} parent=0
    _
  %s6 = ssub.s32 1, %s4
  %s7 = scalar_select 0, %s6, %s4
  // Predicated region
  $region2: #{weighted_mse_loss.1} parent=0 // pred_check
    _
  $region3: #{weighted_mse_loss.1} parent=0 // pred_check_branch
    %9 = sbr.rel (0) target = $region5
  $region4: #{weighted_mse_loss.1} parent=0 // pred_region
    _
  $region5: #{weighted_mse_loss.1} parent=0 // pred_fallthru
    _
  // Predicated region
  $region6: #{weighted_mse_loss.1} parent=0 // pred_check
    _
  $region7: #{weighted_mse_loss.1} parent=0 // pred_check_branch
    %11 = sbr.rel (0) target = $region9
  $region8: #{weighted_mse_loss.1} parent=0 // pred_region
    _
  $region9: #{weighted_mse_loss.1} parent=0 // pred_fallthru
    _
  // Predicated region
  $region10: #{weighted_mse_loss.1} parent=0 // pred_check
    _
  $region11: #{weighted_mse_loss.1} parent=0 // pred_check_branch
    %13 = sbr.rel (0) target = $region13
  $region12: #{weighted_mse_loss.1} parent=0 // pred_region
    _
  $region13: #{weighted_mse_loss.1} parent=0 // pred_fallthru
    _
  %v14 = vld [vmem:[%s0] sm:$0xf]
  %v15 = vld [vmem:[%s1] sm:$0xf]
  %v16 = vsub.f32 %v14, %v15
  %v17 = vmul.f32 %v16, %v16
  %v18 = vld [vmem:[%s2] sm:$0x3]
  %v20 = vlaneseq
  %v21 = vshrl.u32 %v20, 7
  %v22 = vsub.s32 0, %v21
  %v23 = vrot.slane %v18, %v22
  %v24 = vlaneseq
  %v25 = vshrl.u32 %v24, 7
  %v26 = vsub.s32 1, %v25
  %v27 = vrot.slane %v18, %v26
  %v28 = vcombine.low %v23, %v27
  %v30 = vunpack.c.l.s4 1983009808
  %v31 = vunpack.c.0.s8 %v30
  %v32 = vlaneseq
  %v33 = vshrl.u32 %v32, 7
  %v34 = vsub.s32 %v31, %v33
  %v35 = vrot.slane %v28, %v34
  %v37 = vmul.f32 %v17, %v35
  %v40 = vunpack.c.l.s4 1983009808
  %v41 = vunpack.c.0.s8 %v40
  %v42 = vlaneseq
  %v43 = vshrl.u32 %v42, 7
  %v44 = vsub.s32 %v41, %v43
  %v45 = vrot.slane %v37, %v44
  %v46 = vcombine.high %v45, %v45
  %vm49 = vcmask 1041408
  %v50 = vsel %vm49, %v45, 0.0
  %v51 = vsel %vm49, %v46, 0.0
  %v52 = vadd.f32 %v50, %v51
  %53 = vadd.xlane.f32.xlu0 %v52
  %v54 = vpop.xlane.xlu0 %53
  %v55 = vrot.slane %v54, 4
  %v56 = vadd.f32 %v54, %v55
  %v57 = vrot.slane %v56, 2
  %v58 = vadd.f32 %v56, %v57
  %v59 = vrot.slane %v58, 1
  %v60 = vadd.f32 %v58, %v59
  %s61 = vtos %v60
  %v62 = vlaneseq
  %v63 = vshrl.u32 %v62, 7
  %vm64 = vcmp.eq.s32.totalorder %v63, 0
  %v65 = vlaneseq
  %v66 = vand.u32 %v65, 127
  %vm67 = vcmp.eq.s32.totalorder %v66, 0
  %vm68 = vmand %vm64, %vm67
  %v69 = vstv %s61
  %v70 = vsel %vm68, %v69, 0.0
  %71 = vst [vmem:[%s3] sm:$0xff] %v70
  // Predicated region
  $region14: #{weighted_mse_loss.1} parent=0 // pred_check
    _
  $region15: #{weighted_mse_loss.1} parent=0 // pred_check_branch
    %73 = sbr.rel (0) target = $region17
  $region16: #{weighted_mse_loss.1} parent=0 // pred_region
    _
  $region17: #{weighted_mse_loss.1} parent=0 // pred_fallthru
    _
  // Predicated region
  $region18: #{weighted_mse_loss.1} parent=0 // pred_check
    _
  $region19: #{weighted_mse_loss.1} parent=0 // pred_check_branch
    %75 = sbr.rel (0) target = $region21
  $region20: #{weighted_mse_loss.1} parent=0 // pred_region
    _
  $region21: #{weighted_mse_loss.1} parent=0 // pred_fallthru
    _

</llo_original>
